<compile_context>
chip_gen: v6e
topology: v6e:2x2x1
jax: 0.10.0
libtpu: 0.0.40
codegen_flags: <defaults>
</compile_context>

<pallas_src>
import jax
import jax.numpy as jnp
from jax.experimental import pallas as pl
from jax.experimental.pallas import tpu as pltpu

BN_EPS = 1e-5
_VMEM_LIMIT = 32 * 1024 * 1024


def _stats_kernel(p_ref, w_ref, sum_ref, sq_ref):
    """Pass 1: conv-as-matmul + per-(lane)channel sum / sum-of-squares."""
    @pl.when(pl.program_id(0) == 0)
    def _():
        sum_ref[...] = jnp.zeros_like(sum_ref)
        sq_ref[...] = jnp.zeros_like(sq_ref)

    y = jnp.dot(p_ref[...], w_ref[...], preferred_element_type=jnp.float32)
    sum_ref[...] += jnp.sum(y, axis=0, keepdims=True)
    sq_ref[...] += jnp.sum(y * y, axis=0, keepdims=True)


def _apply_kernel(p_ref, w_ref, ss_ref, o_ref):
    """Pass 2: conv-as-matmul + folded-BN FMA + swish, lane-dense store."""
    y = jnp.dot(p_ref[...], w_ref[...], preferred_element_type=jnp.float32)
    z = y * ss_ref[0:1, :] + ss_ref[1:2, :]
    o_ref[...] = (z * jax.nn.sigmoid(z)).astype(o_ref.dtype)


def _pick_tile(m_rows):
    """Largest tile (slab rows) that divides m_rows; prefer 512+ per perf review."""
    for t in (2048, 1024, 512, 256, 128, 64, 32, 16):
        if t <= m_rows and m_rows % t == 0:
            return t
    return m_rows  # full extent is always a legal block


@jax.jit
def stem_in_forward(x_nchw, conv_w, gamma, beta):
    """x_nchw: (N, Cin, H, W); conv_w: (Cout, Cin, 3, 3) (torch layout)."""
    N, Cin, H, W = x_nchw.shape
    Cout = conv_w.shape[0]
    Ho = (H + 2 - 3) // 2 + 1
    Wo = (W + 2 - 3) // 2 + 1
    M = N * Ho * Wo
    K = 9 * Cin

    # ---- glue: NCHW -> NHWC, pad, im2col patch extraction -------------------
    # TODO(synk): fuse the stride-2 patch extraction into the kernel (pl.ANY +
    # manual DMA) to avoid the 9x-duplicated patch array in HBM entirely; the
    # bf16 cast below at least halves that traffic.
    x = jnp.transpose(x_nchw, (0, 2, 3, 1)).astype(jnp.float32)        # (N,H,W,Cin)
    xp = jnp.pad(x, ((0, 0), (1, 1), (1, 1), (0, 0)))
    cols = [xp[:, ky:ky + 2 * Ho:2, kx:kx + 2 * Wo:2, :]
            for ky in range(3) for kx in range(3)]
    patches = jnp.concatenate(cols, axis=-1).reshape(M, K)             # (M, K) f32

    # torch (Cout, Cin, kh, kw) -> (kh, kw, Cin, Cout) -> (K, Cout)
    w2 = jnp.transpose(conv_w.astype(jnp.float32), (2, 3, 1, 0)).reshape(K, Cout)

    # ---- lane-dense packing: group G output rows per slab row ---------------
    group = 1
    if Cout <= 128 and 128 % Cout == 0 and M % (128 // Cout) == 0:
        group = 128 // Cout
    Mg, Kg, Cg = M // group, group * K, group * Cout

    p_slab = patches.reshape(Mg, Kg).astype(jnp.bfloat16)              # (Mg, Kg)
    w_blk = jnp.kron(jnp.eye(group, dtype=jnp.float32), w2).astype(jnp.bfloat16)  # (Kg, Cg)

    tile = _pick_tile(Mg)
    grid = (Mg // tile,)

    p_spec = pl.BlockSpec((tile, Kg), lambda i: (i, 0))
    w_spec = pl.BlockSpec((Kg, Cg), lambda i: (0, 0))

    # ---- pass 1: batch statistics -------------------------------------------
    sums, sqs = pl.pallas_call(
        _stats_kernel,
        out_shape=(jax.ShapeDtypeStruct((1, Cg), jnp.float32),
                   jax.ShapeDtypeStruct((1, Cg), jnp.float32)),
        grid=grid,
        in_specs=[p_spec, w_spec],
        out_specs=(pl.BlockSpec((1, Cg), lambda i: (0, 0)),
                   pl.BlockSpec((1, Cg), lambda i: (0, 0))),
        compiler_params=pltpu.CompilerParams(
            dimension_semantics=("arbitrary",),
            vmem_limit_bytes=_VMEM_LIMIT),
        cost_estimate=pl.CostEstimate(
            flops=2 * Mg * Kg * Cg + 4 * Mg * Cg,
            transcendentals=0,
            bytes_accessed=Mg * Kg * 2 + Kg * Cg * 2 + 2 * Cg * 4),
    )(p_slab, w_blk)

    # ---- fold lane groups -> per-channel BN scale/shift (tiny op) -----------
    s = jnp.sum(sums.reshape(group, Cout), axis=0)
    sq = jnp.sum(sqs.reshape(group, Cout), axis=0)
    mean = s / M
    var = sq / M - mean * mean                     # biased (training-mode) var
    scale = gamma.astype(jnp.float32) * jax.lax.rsqrt(var + BN_EPS)
    shift = beta.astype(jnp.float32) - mean * scale
    ss = jnp.stack([jnp.tile(scale, group), jnp.tile(shift, group)])   # (2, Cg)

    # ---- pass 2: normalize + swish (lane-dense, megacore-parallel) ----------
    out_slab = pl.pallas_call(
        _apply_kernel,
        out_shape=jax.ShapeDtypeStruct((Mg, Cg), jnp.float32),
        grid=grid,
        in_specs=[p_spec, w_spec, pl.BlockSpec((2, Cg), lambda i: (0, 0))],
        out_specs=pl.BlockSpec((tile, Cg), lambda i: (i, 0)),
        compiler_params=pltpu.CompilerParams(
            dimension_semantics=("parallel",),
            vmem_limit_bytes=_VMEM_LIMIT),
        cost_estimate=pl.CostEstimate(
            flops=2 * Mg * Kg * Cg + 3 * Mg * Cg,
            transcendentals=Mg * Cg,
            bytes_accessed=Mg * Kg * 2 + Kg * Cg * 2 + 2 * Cg * 4 + Mg * Cg * 4),
    )(p_slab, w_blk, ss)

    # back to NCHW
    out = out_slab.reshape(N, Ho, Wo, Cout)
    return jnp.transpose(out, (0, 3, 1, 2))


def _reference(x_nchw, conv_w, gamma, beta):
    """Pure-JAX f32 reference of the same forward pass (for self-check)."""
    y = jax.lax.conv_general_dilated(
        x_nchw.astype(jnp.float32), conv_w.astype(jnp.float32),
        window_strides=(2, 2), padding=((1, 1), (1, 1)),
        dimension_numbers=("NCHW", "OIHW", "NCHW"))
    mean = jnp.mean(y, axis=(0, 2, 3), keepdims=True)
    var = jnp.mean((y - mean) ** 2, axis=(0, 2, 3), keepdims=True)
    z = (y - mean) * jax.lax.rsqrt(var + BN_EPS)
    z = z * gamma.reshape(1, -1, 1, 1) + beta.reshape(1, -1, 1, 1)
    return z * jax.nn.sigmoid(z)


if __name__ == "__main__":
    # StemIN(w_in=4, w_out=32), input x: (N=2, Cin=4, H=16, W=16)
    w_in, w_out = 4, 32
    N, H, W = 2, 16, 16

    key = jax.random.PRNGKey(0)
    kx, kw = jax.random.split(key)
    x = jax.random.normal(kx, (N, w_in, H, W), dtype=jnp.float32)
    conv_w = 0.1 * jax.random.normal(kw, (w_out, w_in, 3, 3), dtype=jnp.float32)
    # BatchNorm2d default affine params
    gamma = jnp.ones((w_out,), dtype=jnp.float32)
    beta = jnp.zeros((w_out,), dtype=jnp.float32)

    out = stem_in_forward(x, conv_w, gamma, beta)
    out = jax.block_until_ready(out)

    ref = _reference(x, conv_w, gamma, beta)
    assert out.shape == (N, w_out, H // 2, W // 2), out.shape
    err = float(jnp.max(jnp.abs(out - ref)))
    # bf16 matmul inputs -> loosened tolerance vs the pure-f32 reference.
    assert err < 5e-2, err

    print("KERNEL_OK")
</pallas_src>

<mosaic_0001>
module attributes {stable_mosaic.version = 11 : i64} {
  func.func @_stats_kernel(%arg0: i32, %arg1: memref<32x144xbf16, #tpu.memory_space<vmem>>, %arg2: memref<144x128xbf16, #tpu.memory_space<vmem>>, %arg3: memref<1x128xf32, #tpu.memory_space<vmem>>, %arg4: memref<1x128xf32, #tpu.memory_space<vmem>>) attributes {dimension_semantics = [#tpu.dimension_semantics<arbitrary>], iteration_bounds = array<i64: 1>, scalar_prefetch = 0 : i64, scratch_operands = 0 : i64, tpu.core_type = #tpu.core_type<tc>, window_params = [{transform_indices = @transform_0, window_bounds = array<i64: 32, 144>}, {pipeline_mode = #tpu.pipeline_mode<synchronous>, transform_indices = @transform_1, window_bounds = array<i64: 144, 128>}, {pipeline_mode = #tpu.pipeline_mode<synchronous>, transform_indices = @transform_2, window_bounds = array<i64: 1, 128>}, {pipeline_mode = #tpu.pipeline_mode<synchronous>, transform_indices = @transform_3, window_bounds = array<i64: 1, 128>}]} {
    %c0_i32 = arith.constant 0 : i32
    %0 = arith.cmpi eq, %arg0, %c0_i32 : i32
    %1 = arith.extui %0 : i1 to i32
    %c0_i32_0 = arith.constant 0 : i32
    %2 = arith.cmpi ne, %1, %c0_i32_0 : i32
    scf.if %2 {
      %cst_14 = arith.constant 0.000000e+00 : f32
      %17 = vector.broadcast %cst_14 : f32 to vector<1x128xf32>
      %c0_15 = arith.constant 0 : index
      %c0_16 = arith.constant 0 : index
      %18 = vector.load %arg3[%c0_15, %c0_16] : memref<1x128xf32, #tpu.memory_space<vmem>>, vector<1x128xf32>
      tpu.vector_store %arg3[%c0_15, %c0_16], %17 {strides = array<i32>} : memref<1x128xf32, #tpu.memory_space<vmem>>, vector<1x128xf32>,
      %cst_17 = arith.constant 0.000000e+00 : f32
      %19 = vector.broadcast %cst_17 : f32 to vector<1x128xf32>
      %c0_18 = arith.constant 0 : index
      %c0_19 = arith.constant 0 : index
      %20 = vector.load %arg4[%c0_18, %c0_19] : memref<1x128xf32, #tpu.memory_space<vmem>>, vector<1x128xf32>
      tpu.vector_store %arg4[%c0_18, %c0_19], %19 {strides = array<i32>} : memref<1x128xf32, #tpu.memory_space<vmem>>, vector<1x128xf32>,
    } else {
    }
    %c0 = arith.constant 0 : index
    %c0_1 = arith.constant 0 : index
    %3 = vector.load %arg1[%c0, %c0_1] : memref<32x144xbf16, #tpu.memory_space<vmem>>, vector<32x144xbf16>
    %c0_2 = arith.constant 0 : index
    %c0_3 = arith.constant 0 : index
    %4 = vector.load %arg2[%c0_2, %c0_3] : memref<144x128xbf16, #tpu.memory_space<vmem>>, vector<144x128xbf16>
    %cst = arith.constant dense<0.000000e+00> : vector<32x128xf32>
    %5 = tpu.matmul %3, %4, %cst {dimension_numbers = #tpu.dot_dimension_numbers<[1], [0], [0], [1], [0, 0, 1, 1], [], []>} : vector<32x144xbf16>, vector<144x128xbf16>, vector<32x128xf32> -> vector<32x128xf32>
    %c0_4 = arith.constant 0 : index
    %c0_5 = arith.constant 0 : index
    %6 = vector.load %arg3[%c0_4, %c0_5] : memref<1x128xf32, #tpu.memory_space<vmem>>, vector<1x128xf32>
    %cst_6 = arith.constant dense<0.000000e+00> : vector<128xf32>
    %7 = vector.multi_reduction <add>, %5, %cst_6 [0] : vector<32x128xf32> to vector<128xf32>
    %8 = vector.shape_cast %7 : vector<128xf32> to vector<1x128xf32>
    %9 = arith.addf %6, %8 : vector<1x128xf32>
    %c0_7 = arith.constant 0 : index
    %c0_8 = arith.constant 0 : index
    %10 = vector.load %arg3[%c0_7, %c0_8] : memref<1x128xf32, #tpu.memory_space<vmem>>, vector<1x128xf32>
    tpu.vector_store %arg3[%c0_7, %c0_8], %9 {strides = array<i32>} : memref<1x128xf32, #tpu.memory_space<vmem>>, vector<1x128xf32>,
    %c0_9 = arith.constant 0 : index
    %c0_10 = arith.constant 0 : index
    %11 = vector.load %arg4[%c0_9, %c0_10] : memref<1x128xf32, #tpu.memory_space<vmem>>, vector<1x128xf32>
    %12 = arith.mulf %5, %5 : vector<32x128xf32>
    %cst_11 = arith.constant dense<0.000000e+00> : vector<128xf32>
    %13 = vector.multi_reduction <add>, %12, %cst_11 [0] : vector<32x128xf32> to vector<128xf32>
    %14 = vector.shape_cast %13 : vector<128xf32> to vector<1x128xf32>
    %15 = arith.addf %11, %14 : vector<1x128xf32>
    %c0_12 = arith.constant 0 : index
    %c0_13 = arith.constant 0 : index
    %16 = vector.load %arg4[%c0_12, %c0_13] : memref<1x128xf32, #tpu.memory_space<vmem>>, vector<1x128xf32>
    tpu.vector_store %arg4[%c0_12, %c0_13], %15 {strides = array<i32>} : memref<1x128xf32, #tpu.memory_space<vmem>>, vector<1x128xf32>,
    return
  }
  func.func @transform_0(%arg0: i32) -> (i32, i32) {
    %c0_i32 = arith.constant 0 : i32
    %c0_i32_0 = arith.constant 0 : i32
    return %arg0, %c0_i32 : i32, i32
  }
  func.func @transform_1(%arg0: i32) -> (i32, i32) {
    %c0_i32 = arith.constant 0 : i32
    %c0_i32_0 = arith.constant 0 : i32
    %c0_i32_1 = arith.constant 0 : i32
    return %c0_i32, %c0_i32_0 : i32, i32
  }
  func.func @transform_2(%arg0: i32) -> (i32, i32) {
    %c0_i32 = arith.constant 0 : i32
    %c0_i32_0 = arith.constant 0 : i32
    %c0_i32_1 = arith.constant 0 : i32
    return %c0_i32, %c0_i32_0 : i32, i32
  }
  func.func @transform_3(%arg0: i32) -> (i32, i32) {
    %c0_i32 = arith.constant 0 : i32
    %c0_i32_0 = arith.constant 0 : i32
    %c0_i32_1 = arith.constant 0 : i32
    return %c0_i32, %c0_i32_0 : i32, i32
  }
}

module attributes {stable_mosaic.version = 11 : i64} {
  func.func @_apply_kernel(%arg0: i32, %arg1: memref<32x144xbf16, #tpu.memory_space<vmem>>, %arg2: memref<144x128xbf16, #tpu.memory_space<vmem>>, %arg3: memref<2x128xf32, #tpu.memory_space<vmem>>, %arg4: memref<32x128xf32, #tpu.memory_space<vmem>>) attributes {dimension_semantics = [#tpu.dimension_semantics<parallel>], iteration_bounds = array<i64: 1>, scalar_prefetch = 0 : i64, scratch_operands = 0 : i64, tpu.core_type = #tpu.core_type<tc>, window_params = [{transform_indices = @transform_0, window_bounds = array<i64: 32, 144>}, {pipeline_mode = #tpu.pipeline_mode<synchronous>, transform_indices = @transform_1, window_bounds = array<i64: 144, 128>}, {pipeline_mode = #tpu.pipeline_mode<synchronous>, transform_indices = @transform_2, window_bounds = array<i64: 2, 128>}, {transform_indices = @transform_3, window_bounds = array<i64: 32, 128>}]} {
    %c0 = arith.constant 0 : index
    %c0_0 = arith.constant 0 : index
    %0 = vector.load %arg1[%c0, %c0_0] : memref<32x144xbf16, #tpu.memory_space<vmem>>, vector<32x144xbf16>
    %c0_1 = arith.constant 0 : index
    %c0_2 = arith.constant 0 : index
    %1 = vector.load %arg2[%c0_1, %c0_2] : memref<144x128xbf16, #tpu.memory_space<vmem>>, vector<144x128xbf16>
    %cst = arith.constant dense<0.000000e+00> : vector<32x128xf32>
    %2 = tpu.matmul %0, %1, %cst {dimension_numbers = #tpu.dot_dimension_numbers<[1], [0], [0], [1], [0, 0, 1, 1], [], []>} : vector<32x144xbf16>, vector<144x128xbf16>, vector<32x128xf32> -> vector<32x128xf32>
    %c0_3 = arith.constant 0 : index
    %c0_4 = arith.constant 0 : index
    %3 = vector.load %arg3[%c0_3, %c0_4] : memref<2x128xf32, #tpu.memory_space<vmem>>, vector<1x128xf32>
    %4 = vector.broadcast %3 : vector<1x128xf32> to vector<32x128xf32>
    %5 = arith.mulf %2, %4 : vector<32x128xf32>
    %c1 = arith.constant 1 : index
    %c0_5 = arith.constant 0 : index
    %6 = vector.load %arg3[%c1, %c0_5] : memref<2x128xf32, #tpu.memory_space<vmem>>, vector<1x128xf32>
    %7 = vector.broadcast %6 : vector<1x128xf32> to vector<32x128xf32>
    %8 = arith.addf %5, %7 : vector<32x128xf32>
    %9 = arith.negf %8 : vector<32x128xf32>
    %10 = math.exp %9 : vector<32x128xf32>
    %cst_6 = arith.constant 1.000000e+00 : f32
    %11 = vector.broadcast %cst_6 : f32 to vector<32x128xf32>
    %12 = arith.addf %11, %10 : vector<32x128xf32>
    %13 = arith.divf %11, %12 : vector<32x128xf32>
    %14 = arith.mulf %8, %13 : vector<32x128xf32>
    %c0_7 = arith.constant 0 : index
    %c0_8 = arith.constant 0 : index
    %15 = vector.load %arg4[%c0_7, %c0_8] : memref<32x128xf32, #tpu.memory_space<vmem>>, vector<32x128xf32>
    tpu.vector_store %arg4[%c0_7, %c0_8], %14 {strides = array<i32>} : memref<32x128xf32, #tpu.memory_space<vmem>>, vector<32x128xf32>,
    return
  }
  func.func @transform_0(%arg0: i32) -> (i32, i32) {
    %c0_i32 = arith.constant 0 : i32
    %c0_i32_0 = arith.constant 0 : i32
    return %arg0, %c0_i32 : i32, i32
  }
  func.func @transform_1(%arg0: i32) -> (i32, i32) {
    %c0_i32 = arith.constant 0 : i32
    %c0_i32_0 = arith.constant 0 : i32
    %c0_i32_1 = arith.constant 0 : i32
    return %c0_i32, %c0_i32_0 : i32, i32
  }
  func.func @transform_2(%arg0: i32) -> (i32, i32) {
    %c0_i32 = arith.constant 0 : i32
    %c0_i32_0 = arith.constant 0 : i32
    %c0_i32_1 = arith.constant 0 : i32
    return %c0_i32, %c0_i32_0 : i32, i32
  }
  func.func @transform_3(%arg0: i32) -> (i32, i32) {
    %c0_i32 = arith.constant 0 : i32
    %c0_i32_0 = arith.constant 0 : i32
    return %arg0, %c0_i32 : i32, i32
  }
}

</mosaic_0001>

<llo_original>
// kernel: mul.4
$region0: #{mul.4}
  %s0 = inlined_call_operand.vmem [shape: f32[3,3,4,32], index: 0, kind: input, shape index: {}]
  %s1 = inlined_call_operand.vmem [shape: f32[36,32], index: 1, kind: output, shape index: {}]
  $region1: #{mul.4} parent=0
    #allocation0 [shape = 'u8[36864]{0}', space=vmem, size = 0x9000, scoped, tag = 'scoped mem for input reshape']
    %s3 = sshll.u32 1, 4
    %s4 = ssub.s32 %s3, 1
    %s5 = smul.addr 4, 8
    %s6 = scalar_lea.vmem %s0, %s5
    %v7 = vld [vmem:[%s6] sm:%s4]
    %s8 = scalar_lea.vmem [#allocation0], 64
    %9 = vst [vmem:[%s8] sm:%s4] %v7
    %s10 = smul.addr 4, 7
    %s11 = scalar_lea.vmem %s0, %s10
    %v12 = vld [vmem:[%s11] sm:%s4]
    %s13 = scalar_lea.vmem [#allocation0], 56
    %14 = vst [vmem:[%s13] sm:%s4] %v12
    %s15 = smul.addr 4, 6
    %s16 = scalar_lea.vmem %s0, %s15
    %v17 = vld [vmem:[%s16] sm:%s4]
    %s18 = scalar_lea.vmem [#allocation0], 48
    %19 = vst [vmem:[%s18] sm:%s4] %v17
    %s20 = smul.addr 4, 5
    %s21 = scalar_lea.vmem %s0, %s20
    %v22 = vld [vmem:[%s21] sm:%s4]
    %s23 = scalar_lea.vmem [#allocation0], 40
    %24 = vst [vmem:[%s23] sm:%s4] %v22
    %s25 = smul.addr 4, 4
    %s26 = scalar_lea.vmem %s0, %s25
    %v27 = vld [vmem:[%s26] sm:%s4]
    %s28 = scalar_lea.vmem [#allocation0], 32
    %29 = vst [vmem:[%s28] sm:%s4] %v27
    %s30 = smul.addr 4, 3
    %s31 = scalar_lea.vmem %s0, %s30
    %v32 = vld [vmem:[%s31] sm:%s4]
    %s33 = scalar_lea.vmem [#allocation0], 24
    %34 = vst [vmem:[%s33] sm:%s4] %v32
    %s35 = smul.addr 4, 2
    %s36 = scalar_lea.vmem %s0, %s35
    %v37 = vld [vmem:[%s36] sm:%s4]
    %s38 = scalar_lea.vmem [#allocation0], 16
    %39 = vst [vmem:[%s38] sm:%s4] %v37
    %s40 = scalar_lea.vmem %s0, 4
    %v41 = vld [vmem:[%s40] sm:%s4]
    %s42 = scalar_lea.vmem [#allocation0], 8
    %43 = vst [vmem:[%s42] sm:%s4] %v41
    %v44 = vld [vmem:[%s0] sm:%s4]
    %45 = vst [vmem:[#allocation0] sm:%s4] %v44
    %v46 = vld [vmem:[#allocation0] sm:$0xf]
    %vm47 = vcmask 261120
    %48 = vst.msk [vmem:[%s1] sm:$0xf] %vm47, %v46
    %s49 = scalar_lea.vmem [#allocation0], 8
    %v50 = vld [vmem:[%s49] sm:$0xf]
    %vm51 = vcmask 261120
    %s52 = scalar_lea.vmem %s1, 4
    %53 = vst.msk [vmem:[%s52] sm:$0xf] %vm51, %v50
    %s54 = scalar_lea.vmem [#allocation0], 16
    %v55 = vld [vmem:[%s54] sm:$0xf]
    %vm56 = vcmask 261120
    %s57 = scalar_lea.vmem %s1, 8
    %58 = vst.msk [vmem:[%s57] sm:$0xf] %vm56, %v55
    %s59 = scalar_lea.vmem [#allocation0], 24
    %v60 = vld [vmem:[%s59] sm:$0xf]
    %vm61 = vcmask 261120
    %s62 = scalar_lea.vmem %s1, 12
    %63 = vst.msk [vmem:[%s62] sm:$0xf] %vm61, %v60
    %s64 = scalar_lea.vmem [#allocation0], 32
    %v65 = vld [vmem:[%s64] sm:$0xf]
    %vm66 = vcmask 261120
    %s67 = scalar_lea.vmem %s1, 16
    %68 = vst.msk [vmem:[%s67] sm:$0xf] %vm66, %v65
    %s69 = scalar_lea.vmem [#allocation0], 40
    %v70 = vld [vmem:[%s69] sm:$0xf]
    %vm71 = vcmask 261120
    %s72 = scalar_lea.vmem %s1, 20
    %73 = vst.msk [vmem:[%s72] sm:$0xf] %vm71, %v70
    %s74 = scalar_lea.vmem [#allocation0], 48
    %v75 = vld [vmem:[%s74] sm:$0xf]
    %vm76 = vcmask 261120
    %s77 = scalar_lea.vmem %s1, 24
    %78 = vst.msk [vmem:[%s77] sm:$0xf] %vm76, %v75
    %s79 = scalar_lea.vmem [#allocation0], 56
    %v80 = vld [vmem:[%s79] sm:$0xf]
    %vm81 = vcmask 261120
    %s82 = scalar_lea.vmem %s1, 28
    %83 = vst.msk [vmem:[%s82] sm:$0xf] %vm81, %v80
    %s84 = scalar_lea.vmem [#allocation0], 64
    %v85 = vld [vmem:[%s84] sm:$0xf]
    %vm86 = vcmask 261120
    %s87 = scalar_lea.vmem %s1, 32
    %88 = vst.msk [vmem:[%s87] sm:$0xf] %vm86, %v85

// kernel: tile.13
$region0: #{tile.13}
  #allocation0 [shape = 's32[1]{0}', space=sflag, size = 0x4, scoped, tag = 'scoped memory for tile.13']
  %s0 = inlined_call_operand.vmem [shape: f32[32], index: 0, kind: input, shape index: {}]
  %s1 = inlined_call_operand.vmem [shape: f32[4,32], index: 1, kind: output, shape index: {}]
  // Predicated region
  $region2: #{tile.13} parent=0 // pred_check
    _
  $region3: #{tile.13} parent=0 // pred_check_branch
    %3 = sbr.rel (0) target = $region5
  $region4: #{tile.13} parent=0 // pred_region
    _
  $region5: #{tile.13} parent=0 // pred_fallthru
    _
  %v4 = vld [vmem:[%s0] ss:$0 sm:$0xff]
  %5 = vst [vmem:[%s1] sm:$0xf] %v4

// kernel: tile.18
$region0: #{tile.18}
  %s0 = inlined_call_operand.vmem [shape: f32[4,32], index: 0, kind: input, shape index: {}]
  %s1 = inlined_call_operand.vmem [shape: f32[1,128], index: 1, kind: output, shape index: {}]
  $region1: #{tile.18} parent=0
    #allocation0 [shape = 'u8[4096]{0}', space=vmem, size = 0x1000, scoped, tag = 'scoped mem for output reshape']
    #allocation1 [shape = 'u8[4096]{0}', space=vmem, size = 0x1000, scoped, tag = 'scoped mem for input reshape']
    %s3 = sshll.u32 1, 4
    %s4 = ssub.s32 %s3, 1
    %v5 = vld [vmem:[%s0] sm:%s4]
    %6 = vst [vmem:[#allocation1] sm:%s4] %v5
    %v7 = vld [vmem:[#allocation1] sm:$0x1]
    %vm8 = vcmask 261120
    %9 = vst.msk [vmem:[#allocation0] sm:$0x1] %vm8, %v7
    %s10 = scalar_lea.vmem [#allocation1], 3
    %v11 = vld [vmem:[%s10] sm:$0x1]
    %12 = vrot.lane.b32.xlu0 %v11, 96
    %v13 = vpop.permute.xlu0 %12
    %vm14 = vcmask 1048320
    %15 = vst.msk [vmem:[#allocation0] sm:$0x1] %vm14, %v13
    %s16 = scalar_lea.vmem [#allocation1], 2
    %v17 = vld [vmem:[%s16] sm:$0x1]
    %18 = vrot.lane.b32.xlu0 %v17, 64
    %v19 = vpop.permute.xlu0 %18
    %vm20 = vcmask 785920
    %21 = vst.msk [vmem:[#allocation0] sm:$0x1] %vm20, %v19
    %s22 = scalar_lea.vmem [#allocation1], 1
    %v23 = vld [vmem:[%s22] sm:$0x1]
    %24 = vrot.lane.b32.xlu0 %v23, 32
    %v25 = vpop.permute.xlu0 %24
    %vm26 = vcmask 523520
    %27 = vst.msk [vmem:[#allocation0] sm:$0x1] %vm26, %v25
    %s29 = sshll.u32 1, 1
    %s30 = ssub.s32 %s29, 1
    %v32 = vld [vmem:[#allocation0] sm:%s30]
    %s33 = sshll.u32 1, 1
    %s34 = ssub.s32 %s33, 1
    %35 = vst [vmem:[%s1] sm:%s34] %v32

// kernel: stem_in_forward.2
$region0: #{stem_in_forward.2}
  #allocation0 [shape = 'u32[]', space=smem, size = 0x4, offset = 0x4, fixed_abs, tag = 'smem constant byte address 0x4 - core index']
  #allocation1 [shape = 'u32[144,128]{1,0:T(1,128)}', space=vmem, size = 0x12000, scoped, tag = 'internal scratch']
  %s0 = inlined_call_operand.vmem [shape: bf16[32,144], index: 0, kind: input, shape index: {}]
  %s1 = inlined_call_operand.vmem [shape: bf16[144,128], index: 1, kind: input, shape index: {}]
  %s2 = inlined_call_operand.vmem [shape: f32[1,128], index: 2, kind: output, shape index: {0}]
  %s3 = inlined_call_operand.vmem [shape: f32[1,128], index: 3, kind: output, shape index: {1}]
  %4 = xla_tuple %s2, %s3
  %s5 = sld [smem:[#allocation0]]
  $region30: #{stem_in_forward.2} parent=0
    _
  %s7 = ssub.s32 1, %s5
  %s8 = scalar_select 0, %s7, %s5
  // Predicated region
  $region2: #{stem_in_forward.2} parent=0 // pred_check
    _
  $region3: #{stem_in_forward.2} parent=0 // pred_check_branch
    %10 = sbr.rel (0) target = $region5
  $region4: #{stem_in_forward.2} parent=0 // pred_region
    _
  $region5: #{stem_in_forward.2} parent=0 // pred_fallthru
    _
  // Predicated region
  $region6: #{stem_in_forward.2} parent=0 // pred_check
    _
  $region7: #{stem_in_forward.2} parent=0 // pred_check_branch
    %12 = sbr.rel (0) target = $region9
  $region8: #{stem_in_forward.2} parent=0 // pred_region
    _
  $region9: #{stem_in_forward.2} parent=0 // pred_fallthru
    _
  %p14 = scmp.eq.s32.totalorder 0, 0
  // Predicated region
  $region10: #{stem_in_forward.2} parent=0 // pred_check
    %p15 = pneg %p14
  $region11: #{stem_in_forward.2} parent=0 // pred_check_branch
    %17 = sbr.rel (%p15) target = $region13
  $region12: #{stem_in_forward.2} parent=0 // pred_region
    %18 = vst [vmem:[%s2] sm:$0x1] 0.0
    %19 = vst [vmem:[%s3] sm:$0x1] 0.0
  $region13: #{stem_in_forward.2} parent=0 // pred_fallthru
    _
  %v20 = vld [vmem:[%s0] sm:$0xff]
  %v21 = vld [vmem:[%s0 + $0x8] sm:$0xff]
  %v22 = vld [vmem:[%s0 + $0x10] sm:$0xff]
  %v23 = vld [vmem:[%s0 + $0x18] sm:$0xff]
  %v24 = vld [vmem:[%s1] sm:$0xf]
  %v25 = vld [vmem:[%s1 + $0x4] sm:$0xf]
  %v26 = vld [vmem:[%s1 + $0x8] sm:$0xf]
  %v27 = vld [vmem:[%s1 + $0xc] sm:$0xf]
  %v28 = vld [vmem:[%s1 + $0x10] sm:$0xf]
  %v29 = vld [vmem:[%s1 + $0x14] sm:$0xf]
  %v30 = vld [vmem:[%s1 + $0x18] sm:$0xf]
  %v31 = vld [vmem:[%s1 + $0x1c] sm:$0xf]
  %v32 = vld [vmem:[%s1 + $0x20] sm:$0xf]
  %v33 = vld [vmem:[%s1 + $0x24] sm:$0xf]
  %v34 = vld [vmem:[%s1 + $0x28] sm:$0xf]
  %v35 = vld [vmem:[%s1 + $0x2c] sm:$0xf]
  %v36 = vld [vmem:[%s1 + $0x30] sm:$0xf]
  %v37 = vld [vmem:[%s1 + $0x34] sm:$0xf]
  %v38 = vld [vmem:[%s1 + $0x38] sm:$0xf]
  %v39 = vld [vmem:[%s1 + $0x3c] sm:$0xf]
  %v40 = vld [vmem:[%s1 + $0x40] sm:$0xf]
  %v41 = vld [vmem:[%s1 + $0x44] sm:$0xf]
  %v46 = vunpack.c.l.b16 %v20
  %v47 = vunpack.c.h.b16 %v20
  %v48 = vunpack.c.l.b16 %v21
  %v49 = vunpack.c.h.b16 %v21
  %v50 = vunpack.c.l.b16 %v22
  %v51 = vunpack.c.h.b16 %v22
  %v52 = vunpack.c.l.b16 %v23
  %v53 = vunpack.c.h.b16 %v23
  %v54 = vpack.c.b16 %v48, %v46
  %v55 = vpack.c.b16 %v49, %v47
  %v56 = vpack.c.b16 %v52, %v50
  %v57 = vpack.c.b16 %v53, %v51
  %v78 = vunpack.c.l.b16 %v24
  %v79 = vunpack.c.l.b16 %v25
  %v80 = vunpack.c.l.b16 %v26
  %v81 = vunpack.c.l.b16 %v27
  %v82 = vunpack.c.l.b16 %v28
  %v83 = vunpack.c.l.b16 %v29
  %v84 = vunpack.c.l.b16 %v30
  %v85 = vunpack.c.l.b16 %v31
  %v86 = vunpack.c.l.b16 %v32
  %v87 = vunpack.c.l.b16 %v33
  %v88 = vunpack.c.l.b16 %v34
  %v89 = vunpack.c.l.b16 %v35
  %v90 = vunpack.c.l.b16 %v36
  %v91 = vunpack.c.l.b16 %v37
  %v92 = vunpack.c.l.b16 %v38
  %v93 = vunpack.c.l.b16 %v39
  %v94 = vunpack.c.l.b16 %v40
  %v95 = vunpack.c.l.b16 %v41
  %v96 = vpack.c.b16 %v79, %v78
  %v97 = vpack.c.b16 %v81, %v80
  %v98 = vpack.c.b16 %v83, %v82
  %v99 = vpack.c.b16 %v85, %v84
  %v100 = vpack.c.b16 %v87, %v86
  %v101 = vpack.c.b16 %v89, %v88
  %v102 = vpack.c.b16 %v91, %v90
  %v103 = vpack.c.b16 %v93, %v92
  %v104 = vpack.c.b16 %v95, %v94
  %vm114 = vcmask 130048
  %v116 = vsel %vm114, %v55, 0
  %v119 = vsel %vm114, %v57, 0
  %121 = vmatprep.subr.bf16.mxu0 0
  %122 = vmatpush1.bf16.msra.mxu0 %v103
  %123 = vmatprep.subr.bf16.mxu0 0
  %124 = vmatpush1.bf16.msra.mxu0 %v102
  %125 = vmatprep.subr.bf16.mxu0 0
  %126 = vmatpush1.bf16.msra.mxu0 %v101
  %127 = vmatprep.subr.bf16.mxu0 0
  %128 = vmatpush1.bf16.msra.mxu0 %v100
  %129 = vmatprep.subr.bf16.mxu0 0
  %130 = vmatpush1.bf16.msra.mxu0 %v99
  %131 = vmatprep.subr.bf16.mxu0 0
  %132 = vmatpush1.bf16.msra.mxu0 %v98
  %133 = vmatprep.subr.bf16.mxu0 0
  %134 = vmatpush1.bf16.msra.mxu0 %v97
  %135 = vmatprep.subr.bf16.mxu0 0
  %136 = vmatpush1.bf16.msra.mxu0 %v96
  %137 = vmatprep.subr.bf16.mxu0 0
  %138 = vmatpush2.bf16.msra.mxu0 0
  %139 = vmatprep.subr.bf16.mxu0 0
  %140 = vmatpush2.bf16.msra.mxu0 0
  %141 = vmatprep.subr.bf16.mxu0 0
  %142 = vmatpush2.bf16.msra.mxu0 0
  %143 = vmatprep.subr.bf16.mxu0 0
  %144 = vmatpush2.bf16.msra.mxu0 0
  %145 = vmatprep.subr.bf16.mxu0 0
  %146 = vmatpush2.bf16.msra.mxu0 0
  %147 = vmatprep.subr.bf16.mxu0 0
  %148 = vmatpush2.bf16.msra.mxu0 0
  %149 = vmatprep.subr.bf16.mxu0 0
  %150 = vmatpush2.bf16.msra.mxu0 0
  %151 = vmatprep.subr.bf16.mxu0 0
  %152 = vmatpush2.bf16.msra.mxu0 %v104
  %153 = vmatprep.mubr.bf16.mxu0 %v116
  %154 = vmatmul.mubr.bf16.gmra.mxu0 %v54
  %v155 = vpop.f32.mrf.mxu0
  %v156 = vadd.f32 0.0, %v155
  %v157 = vpop.f32.mrf.mxu0
  %v158 = vpop.f32.mrf.mxu0
  %v159 = vadd.f32 0.0, %v158
  %v160 = vpop.f32.mrf.mxu0
  %161 = vmatprep.mubr.bf16.mxu0 %v119
  %162 = vmatmul.mubr.bf16.gmra.mxu0 %v56
  %v163 = vpop.f32.mrf.mxu0
  %v164 = vadd.f32 0.0, %v163
  %v165 = vpop.f32.mrf.mxu0
  %v166 = vpop.f32.mrf.mxu0
  %v167 = vadd.f32 0.0, %v166
  %v168 = vpop.f32.mrf.mxu0
  %169 = vdwg.mxu0
  %v170 = vld [vmem:[%s2] sm:$0x1]
  %v171 = vadd.f32 %v156, %v159
  %v172 = vadd.f32 %v171, %v164
  %v173 = vadd.f32 %v172, %v167
  %v174 = vrot.slane %v173, 4
  %v175 = vadd.f32 %v173, %v174
  %v176 = vrot.slane %v175, 2
  %v177 = vadd.f32 %v175, %v176
  %v178 = vrot.slane %v177, 1
  %v179 = vadd.f32 %v177, %v178
  %v180 = vadd.f32 %v170, %v179
  %181 = vst [vmem:[%s2] sm:$0x1] %v180
  %v182 = vld [vmem:[%s3] sm:$0x1]
  %v183 = vmul.f32 %v156, %v156
  %v184 = vmul.f32 %v159, %v159
  %v185 = vmul.f32 %v164, %v164
  %v186 = vmul.f32 %v167, %v167
  %v187 = vadd.f32 %v183, %v184
  %v188 = vadd.f32 %v187, %v185
  %v189 = vadd.f32 %v188, %v186
  %v190 = vrot.slane %v189, 4
  %v191 = vadd.f32 %v189, %v190
  %v192 = vrot.slane %v191, 2
  %v193 = vadd.f32 %v191, %v192
  %v194 = vrot.slane %v193, 1
  %v195 = vadd.f32 %v193, %v194
  %v196 = vadd.f32 %v182, %v195
  %197 = vst [vmem:[%s3] sm:$0x1] %v196
  // Predicated region
  $region14: #{stem_in_forward.2} parent=0 // pred_check
    _
  $region15: #{stem_in_forward.2} parent=0 // pred_check_branch
    %199 = sbr.rel (0) target = $region17
  $region16: #{stem_in_forward.2} parent=0 // pred_region
    _
  $region17: #{stem_in_forward.2} parent=0 // pred_fallthru
    _
  // Predicated region
  $region18: #{stem_in_forward.2} parent=0 // pred_check
    _
  $region19: #{stem_in_forward.2} parent=0 // pred_check_branch
    %201 = sbr.rel (0) target = $region21
  $region20: #{stem_in_forward.2} parent=0 // pred_region
    _
  $region21: #{stem_in_forward.2} parent=0 // pred_fallthru
    _
  // Predicated region
  $region22: #{stem_in_forward.2} parent=0 // pred_check
    _
  $region23: #{stem_in_forward.2} parent=0 // pred_check_branch
    %203 = sbr.rel (0) target = $region25
  $region24: #{stem_in_forward.2} parent=0 // pred_region
    _
  $region25: #{stem_in_forward.2} parent=0 // pred_fallthru
    _
  // Predicated region
  $region26: #{stem_in_forward.2} parent=0 // pred_check
    _
  $region27: #{stem_in_forward.2} parent=0 // pred_check_branch
    %205 = sbr.rel (0) target = $region29
  $region28: #{stem_in_forward.2} parent=0 // pred_region
    _
  $region29: #{stem_in_forward.2} parent=0 // pred_fallthru
    _

// kernel: stem_in_forward.3
$region0: #{stem_in_forward.3}
  #allocation0 [shape = 'u32[]', space=smem, size = 0x4, offset = 0x4, fixed_abs, tag = 'smem constant byte address 0x4 - core index']
  #allocation1 [shape = 'u32[144,128]{1,0:T(1,128)}', space=vmem, size = 0x12000, scoped, tag = 'internal scratch']
  %s0 = inlined_call_operand.vmem [shape: bf16[32,144], index: 0, kind: input, shape index: {}]
  %s1 = inlined_call_operand.vmem [shape: bf16[144,128], index: 1, kind: input, shape index: {}]
  %s2 = inlined_call_operand.vmem [shape: f32[2,128], index: 2, kind: input, shape index: {}]
  %s3 = inlined_call_operand.vmem [shape: f32[32,128], index: 3, kind: output, shape index: {}]
  %s4 = sld [smem:[#allocation0]]
  $region22: #{stem_in_forward.3} parent=0
    _
  %s6 = ssub.s32 1, %s4
  %s7 = scalar_select 0, %s6, %s4
  // Predicated region
  $region2: #{stem_in_forward.3} parent=0 // pred_check
    _
  $region3: #{stem_in_forward.3} parent=0 // pred_check_branch
    %9 = sbr.rel (0) target = $region5
  $region4: #{stem_in_forward.3} parent=0 // pred_region
    _
  $region5: #{stem_in_forward.3} parent=0 // pred_fallthru
    _
  // Predicated region
  $region6: #{stem_in_forward.3} parent=0 // pred_check
    _
  $region7: #{stem_in_forward.3} parent=0 // pred_check_branch
    %11 = sbr.rel (0) target = $region9
  $region8: #{stem_in_forward.3} parent=0 // pred_region
    _
  $region9: #{stem_in_forward.3} parent=0 // pred_fallthru
    _
  // Predicated region
  $region10: #{stem_in_forward.3} parent=0 // pred_check
    _
  $region11: #{stem_in_forward.3} parent=0 // pred_check_branch
    %13 = sbr.rel (0) target = $region13
  $region12: #{stem_in_forward.3} parent=0 // pred_region
    _
  $region13: #{stem_in_forward.3} parent=0 // pred_fallthru
    _
  %v15 = vld [vmem:[%s0] sm:$0xff]
  %v16 = vld [vmem:[%s0 + $0x8] sm:$0xff]
  %v17 = vld [vmem:[%s0 + $0x10] sm:$0xff]
  %v18 = vld [vmem:[%s0 + $0x18] sm:$0xff]
  %v19 = vld [vmem:[%s1] sm:$0xf]
  %v20 = vld [vmem:[%s1 + $0x4] sm:$0xf]
  %v21 = vld [vmem:[%s1 + $0x8] sm:$0xf]
  %v22 = vld [vmem:[%s1 + $0xc] sm:$0xf]
  %v23 = vld [vmem:[%s1 + $0x10] sm:$0xf]
  %v24 = vld [vmem:[%s1 + $0x14] sm:$0xf]
  %v25 = vld [vmem:[%s1 + $0x18] sm:$0xf]
  %v26 = vld [vmem:[%s1 + $0x1c] sm:$0xf]
  %v27 = vld [vmem:[%s1 + $0x20] sm:$0xf]
  %v28 = vld [vmem:[%s1 + $0x24] sm:$0xf]
  %v29 = vld [vmem:[%s1 + $0x28] sm:$0xf]
  %v30 = vld [vmem:[%s1 + $0x2c] sm:$0xf]
  %v31 = vld [vmem:[%s1 + $0x30] sm:$0xf]
  %v32 = vld [vmem:[%s1 + $0x34] sm:$0xf]
  %v33 = vld [vmem:[%s1 + $0x38] sm:$0xf]
  %v34 = vld [vmem:[%s1 + $0x3c] sm:$0xf]
  %v35 = vld [vmem:[%s1 + $0x40] sm:$0xf]
  %v36 = vld [vmem:[%s1 + $0x44] sm:$0xf]
  %v41 = vunpack.c.l.b16 %v15
  %v42 = vunpack.c.h.b16 %v15
  %v43 = vunpack.c.l.b16 %v16
  %v44 = vunpack.c.h.b16 %v16
  %v45 = vunpack.c.l.b16 %v17
  %v46 = vunpack.c.h.b16 %v17
  %v47 = vunpack.c.l.b16 %v18
  %v48 = vunpack.c.h.b16 %v18
  %v49 = vpack.c.b16 %v43, %v41
  %v50 = vpack.c.b16 %v44, %v42
  %v51 = vpack.c.b16 %v47, %v45
  %v52 = vpack.c.b16 %v48, %v46
  %v73 = vunpack.c.l.b16 %v19
  %v74 = vunpack.c.l.b16 %v20
  %v75 = vunpack.c.l.b16 %v21
  %v76 = vunpack.c.l.b16 %v22
  %v77 = vunpack.c.l.b16 %v23
  %v78 = vunpack.c.l.b16 %v24
  %v79 = vunpack.c.l.b16 %v25
  %v80 = vunpack.c.l.b16 %v26
  %v81 = vunpack.c.l.b16 %v27
  %v82 = vunpack.c.l.b16 %v28
  %v83 = vunpack.c.l.b16 %v29
  %v84 = vunpack.c.l.b16 %v30
  %v85 = vunpack.c.l.b16 %v31
  %v86 = vunpack.c.l.b16 %v32
  %v87 = vunpack.c.l.b16 %v33
  %v88 = vunpack.c.l.b16 %v34
  %v89 = vunpack.c.l.b16 %v35
  %v90 = vunpack.c.l.b16 %v36
  %v91 = vpack.c.b16 %v74, %v73
  %v92 = vpack.c.b16 %v76, %v75
  %v93 = vpack.c.b16 %v78, %v77
  %v94 = vpack.c.b16 %v80, %v79
  %v95 = vpack.c.b16 %v82, %v81
  %v96 = vpack.c.b16 %v84, %v83
  %v97 = vpack.c.b16 %v86, %v85
  %v98 = vpack.c.b16 %v88, %v87
  %v99 = vpack.c.b16 %v90, %v89
  %vm109 = vcmask 130048
  %v111 = vsel %vm109, %v50, 0
  %v114 = vsel %vm109, %v52, 0
  %116 = vmatprep.subr.bf16.mxu0 0
  %117 = vmatpush1.bf16.msra.mxu0 %v98
  %118 = vmatprep.subr.bf16.mxu0 0
  %119 = vmatpush1.bf16.msra.mxu0 %v97
  %120 = vmatprep.subr.bf16.mxu0 0
  %121 = vmatpush1.bf16.msra.mxu0 %v96
  %122 = vmatprep.subr.bf16.mxu0 0
  %123 = vmatpush1.bf16.msra.mxu0 %v95
  %124 = vmatprep.subr.bf16.mxu0 0
  %125 = vmatpush1.bf16.msra.mxu0 %v94
  %126 = vmatprep.subr.bf16.mxu0 0
  %127 = vmatpush1.bf16.msra.mxu0 %v93
  %128 = vmatprep.subr.bf16.mxu0 0
  %129 = vmatpush1.bf16.msra.mxu0 %v92
  %130 = vmatprep.subr.bf16.mxu0 0
  %131 = vmatpush1.bf16.msra.mxu0 %v91
  %132 = vmatprep.subr.bf16.mxu0 0
  %133 = vmatpush2.bf16.msra.mxu0 0
  %134 = vmatprep.subr.bf16.mxu0 0
  %135 = vmatpush2.bf16.msra.mxu0 0
  %136 = vmatprep.subr.bf16.mxu0 0
  %137 = vmatpush2.bf16.msra.mxu0 0
  %138 = vmatprep.subr.bf16.mxu0 0
  %139 = vmatpush2.bf16.msra.mxu0 0
  %140 = vmatprep.subr.bf16.mxu0 0
  %141 = vmatpush2.bf16.msra.mxu0 0
  %142 = vmatprep.subr.bf16.mxu0 0
  %143 = vmatpush2.bf16.msra.mxu0 0
  %144 = vmatprep.subr.bf16.mxu0 0
  %145 = vmatpush2.bf16.msra.mxu0 0
  %146 = vmatprep.subr.bf16.mxu0 0
  %147 = vmatpush2.bf16.msra.mxu0 %v99
  %148 = vmatprep.mubr.bf16.mxu0 %v111
  %149 = vmatmul.mubr.bf16.gmra.mxu0 %v49
  %v150 = vpop.f32.mrf.mxu0
  %v151 = vadd.f32 0.0, %v150
  %v152 = vpop.f32.mrf.mxu0
  %v153 = vpop.f32.mrf.mxu0
  %v154 = vadd.f32 0.0, %v153
  %v155 = vpop.f32.mrf.mxu0
  %156 = vmatprep.mubr.bf16.mxu0 %v114
  %157 = vmatmul.mubr.bf16.gmra.mxu0 %v51
  %v158 = vpop.f32.mrf.mxu0
  %v159 = vadd.f32 0.0, %v158
  %v160 = vpop.f32.mrf.mxu0
  %v161 = vpop.f32.mrf.mxu0
  %v162 = vadd.f32 0.0, %v161
  %v163 = vpop.f32.mrf.mxu0
  %164 = vdwg.mxu0
  %v165 = vld [vmem:[%s2] sm:$0x1]
  %v166 = vlaneseq
  %v167 = vshrl.u32 %v166, 7
  %v168 = vsub.s32 0, %v167
  %v169 = vrot.slane %v165, %v168
  %v170 = vmul.f32 %v151, %v169
  %v171 = vmul.f32 %v154, %v169
  %v172 = vmul.f32 %v159, %v169
  %v173 = vmul.f32 %v162, %v169
  %v174 = vld [vmem:[%s2 + $0x1] sm:$0x1]
  %v175 = vlaneseq
  %v176 = vshrl.u32 %v175, 7
  %v177 = vsub.s32 0, %v176
  %v178 = vrot.slane %v174, %v177
  %v179 = vadd.f32 %v170, %v178
  %v180 = vadd.f32 %v171, %v178
  %v181 = vadd.f32 %v172, %v178
  %v182 = vadd.f32 %v173, %v178
  %v183 = vxor.u32 %v179, 2147483648
  %v184 = vxor.u32 %v180, 2147483648
  %v185 = vxor.u32 %v181, 2147483648
  %v186 = vxor.u32 %v182, 2147483648
  %v187 = vmul.f32 %v183, 1.442695
  %v188 = vpow.pop %v187
  %v189 = vmul.f32 %v184, 1.442695
  %v190 = vpow.pop %v189
  %v191 = vmul.f32 %v185, 1.442695
  %v192 = vpow.pop %v191
  %v193 = vmul.f32 %v186, 1.442695
  %v194 = vpow.pop %v193
  %v195 = vadd.f32 %v188, 1.0
  %v196 = vadd.f32 %v190, 1.0
  %v197 = vadd.f32 %v192, 1.0
  %v198 = vadd.f32 %v194, 1.0
  %v199 = vrcp.pop %v195
  %v200 = vmul.f32 1.0, %v199
  %v201 = vrcp.pop %v196
  %v202 = vmul.f32 1.0, %v201
  %v203 = vrcp.pop %v197
  %v204 = vmul.f32 1.0, %v203
  %v205 = vrcp.pop %v198
  %v206 = vmul.f32 1.0, %v205
  %v207 = vmul.f32 %v179, %v200
  %v208 = vmul.f32 %v180, %v202
  %v209 = vmul.f32 %v181, %v204
  %v210 = vmul.f32 %v182, %v206
  %211 = vst [vmem:[%s3] sm:$0xff] %v207
  %212 = vst [vmem:[%s3 + $0x8] sm:$0xff] %v208
  %213 = vst [vmem:[%s3 + $0x10] sm:$0xff] %v209
  %214 = vst [vmem:[%s3 + $0x18] sm:$0xff] %v210
  // Predicated region
  $region14: #{stem_in_forward.3} parent=0 // pred_check
    _
  $region15: #{stem_in_forward.3} parent=0 // pred_check_branch
    %216 = sbr.rel (0) target = $region17
  $region16: #{stem_in_forward.3} parent=0 // pred_region
    _
  $region17: #{stem_in_forward.3} parent=0 // pred_fallthru
    _
  // Predicated region
  $region18: #{stem_in_forward.3} parent=0 // pred_check
    _
  $region19: #{stem_in_forward.3} parent=0 // pred_check_branch
    %218 = sbr.rel (0) target = $region21
  $region20: #{stem_in_forward.3} parent=0 // pred_region
    _
  $region21: #{stem_in_forward.3} parent=0 // pred_fallthru
    _

</llo_original>
